<compile_context>
chip_gen: v5e
topology: v5e:2x2
jax: 0.10.0
libtpu: 0.0.40
codegen_flags: <defaults>
</compile_context>

<pallas_src>
import jax
import jax.numpy as jnp
from jax.experimental import pallas as pl
from jax.experimental.pallas import tpu as pltpu


def _conv_gemm_bias_kernel(p_ref, w_ref, b_ref, o_ref):
    # p_ref: (K, M)    im2col patches, K = Cin*KH*KW, M = N*Ho*Wo (lanes)
    # w_ref: (Cout, K) flattened OIHW weight
    # b_ref: (Cout, 1) bias (sublane broadcast)
    # o_ref: (Cout, M) lane-dense transposed output
    acc = jnp.dot(w_ref[...], p_ref[...], preferred_element_type=jnp.float32)
    o_ref[...] = (acc + b_ref[...]).astype(o_ref.dtype)


@jax.jit
def conv2d_pallas(x_nchw, w_oihw, bias):
    """torch.nn.Conv2d(stride=1, padding=0) forward, NCHW in / NCHW out."""
    N, Cin, H, W = x_nchw.shape
    Cout, _, KH, KW = w_oihw.shape
    Ho, Wo = H - KH + 1, W - KW + 1
    K = Cin * KH * KW
    M = N * Ho * Wo

    # --- im2col in the wrapper (pure layout, zero FLOPs) ------------------
    # patches[cin*KH*KW + kh*KW + kw, n*Ho*Wo + ho*Wo + wo] = x[n, cin, ho+kh, wo+kw]
    taps = []
    for kh in range(KH):
        for kw in range(KW):
            taps.append(x_nchw[:, :, kh:kh + Ho, kw:kw + Wo])    # (N, Cin, Ho, Wo)
    pat = jnp.stack(taps, axis=2)                                # (N, Cin, KH*KW, Ho, Wo)
    patches = jnp.transpose(pat, (1, 2, 0, 3, 4)).reshape(K, M)  # (27, 392)

    # Row-major reshape of OIHW matches the (cin, kh, kw) row order above.
    w2d = w_oihw.reshape(Cout, K)        # (6, 27)
    b2d = bias.reshape(Cout, 1)          # (6, 1)

    # --- single grid-free Pallas invocation: GEMM + bias on the MXU -------
    out2d = pl.pallas_call(
        _conv_gemm_bias_kernel,
        out_shape=jax.ShapeDtypeStruct((Cout, M), x_nchw.dtype),
        in_specs=[
            pl.BlockSpec(memory_space=pltpu.MemorySpace.VMEM),
            pl.BlockSpec(memory_space=pltpu.MemorySpace.VMEM),
            pl.BlockSpec(memory_space=pltpu.MemorySpace.VMEM),
        ],
        out_specs=pl.BlockSpec(memory_space=pltpu.MemorySpace.VMEM),
    )(patches, w2d, b2d)

    # (Cout, N*Ho*Wo) -> (N, Cout, Ho, Wo): torch NCHW output.
    return jnp.transpose(out2d.reshape(Cout, N, Ho, Wo), (1, 0, 2, 3))


if __name__ == "__main__":
    key = jax.random.PRNGKey(0)
    kx, kw, kb = jax.random.split(key, 3)

    # Shapes implied by the module: Conv2d(3, 6, 3); small batch / spatial.
    N, Cin, H, W = 2, 3, 16, 16
    Cout, KH, KW = 6, 3, 3

    x = jax.random.normal(kx, (N, Cin, H, W), dtype=jnp.float32)
    # Deterministic synthetic parameters (torch Conv2d-style uniform init).
    fan_in = Cin * KH * KW
    bound = 1.0 / (fan_in ** 0.5)
    weight = jax.random.uniform(kw, (Cout, Cin, KH, KW),
                                minval=-bound, maxval=bound, dtype=jnp.float32)
    bias = jax.random.uniform(kb, (Cout,),
                              minval=-bound, maxval=bound, dtype=jnp.float32)

    out = conv2d_pallas(x, weight, bias)
    out = jax.block_until_ready(out)

    # Reference: XLA conv (same semantics as torch Conv2d, VALID padding) + bias.
    ref = jax.lax.conv_general_dilated(
        x, weight, window_strides=(1, 1), padding="VALID",
        dimension_numbers=("NCHW", "OIHW", "NCHW")) + bias[None, :, None, None]

    assert out.shape == (N, Cout, H - KH + 1, W - KW + 1)
    assert jnp.allclose(out, ref, atol=1e-4, rtol=1e-4)

    print("KERNEL_OK")
</pallas_src>

<mosaic_0001>
module attributes {stable_mosaic.version = 11 : i64} {
  func.func @_conv_gemm_bias_kernel(%arg0: memref<27x392xf32, #tpu.memory_space<vmem>>, %arg1: memref<6x27xf32, #tpu.memory_space<vmem>>, %arg2: memref<6x1xf32, #tpu.memory_space<vmem>>, %arg3: memref<6x392xf32, #tpu.memory_space<vmem>>) attributes {dimension_semantics = [], scalar_prefetch = 0 : i64, scratch_operands = 0 : i64, tpu.core_type = #tpu.core_type<tc>} {
    %c0 = arith.constant 0 : index
    %c0_0 = arith.constant 0 : index
    %0 = vector.load %arg1[%c0, %c0_0] : memref<6x27xf32, #tpu.memory_space<vmem>>, vector<6x27xf32>
    %c0_1 = arith.constant 0 : index
    %c0_2 = arith.constant 0 : index
    %1 = vector.load %arg0[%c0_1, %c0_2] : memref<27x392xf32, #tpu.memory_space<vmem>>, vector<27x392xf32>
    %cst = arith.constant dense<0.000000e+00> : vector<6x392xf32>
    %2 = tpu.matmul %0, %1, %cst {dimension_numbers = #tpu.dot_dimension_numbers<[1], [0], [0], [1], [0, 0, 1, 1], [], []>} : vector<6x27xf32>, vector<27x392xf32>, vector<6x392xf32> -> vector<6x392xf32>
    %c0_3 = arith.constant 0 : index
    %c0_4 = arith.constant 0 : index
    %3 = vector.load %arg2[%c0_3, %c0_4] : memref<6x1xf32, #tpu.memory_space<vmem>>, vector<6x1xf32>
    %4 = vector.broadcast %3 : vector<6x1xf32> to vector<6x392xf32>
    %5 = arith.addf %2, %4 : vector<6x392xf32>
    %c0_5 = arith.constant 0 : index
    %c0_6 = arith.constant 0 : index
    %6 = vector.load %arg3[%c0_5, %c0_6] : memref<6x392xf32, #tpu.memory_space<vmem>>, vector<6x392xf32>
    tpu.vector_store %arg3[%c0_5, %c0_6], %5 {strides = array<i32>} : memref<6x392xf32, #tpu.memory_space<vmem>>, vector<6x392xf32>,
    return
  }
}

</mosaic_0001>

<llo_original>
// kernel: conv2d_pallas.1
$region0: #{conv2d_pallas.1}
  #allocation0 [shape = 'u32[]', space=smem, size = 0x4, offset = 0x4, fixed_abs, tag = 'smem constant byte address 0x4 - core index']
  #allocation1 [shape = 'u32[72,128]{1,0:T(1,128)}', space=vmem, size = 0x9000, scoped, tag = 'internal scratch']
  %s0 = inlined_call_operand.vmem [shape: f32[27,392], index: 0, kind: input, shape index: {}]
  %s1 = inlined_call_operand.vmem [shape: f32[6,27], index: 1, kind: input, shape index: {}]
  %s2 = inlined_call_operand.vmem [shape: f32[6,1], index: 2, kind: input, shape index: {}]
  %s3 = inlined_call_operand.vmem [shape: f32[6,392], index: 3, kind: output, shape index: {}]
  %s4 = sld [smem:[#allocation0]]
  $region22: #{conv2d_pallas.1} parent=0
    _
  %s6 = ssub.s32 1, %s4
  %s7 = scalar_select 0, %s6, %s4
  // Predicated region
  $region2: #{conv2d_pallas.1} parent=0 // pred_check
    _
  $region3: #{conv2d_pallas.1} parent=0 // pred_check_branch
    %9 = sbr.rel (0) target = $region5
  $region4: #{conv2d_pallas.1} parent=0 // pred_region
    _
  $region5: #{conv2d_pallas.1} parent=0 // pred_fallthru
    _
  // Predicated region
  $region6: #{conv2d_pallas.1} parent=0 // pred_check
    _
  $region7: #{conv2d_pallas.1} parent=0 // pred_check_branch
    %11 = sbr.rel (0) target = $region9
  $region8: #{conv2d_pallas.1} parent=0 // pred_region
    _
  $region9: #{conv2d_pallas.1} parent=0 // pred_fallthru
    _
  // Predicated region
  $region10: #{conv2d_pallas.1} parent=0 // pred_check
    _
  $region11: #{conv2d_pallas.1} parent=0 // pred_check_branch
    %13 = sbr.rel (0) target = $region13
  $region12: #{conv2d_pallas.1} parent=0 // pred_region
    _
  $region13: #{conv2d_pallas.1} parent=0 // pred_fallthru
    _
  %v14 = vld [vmem:[%s1] sm:$0x3f]
  %v15 = vld [vmem:[%s0] sm:$0xff]
  %v16 = vld [vmem:[%s0 + $0x8] sm:$0xff]
  %v17 = vld [vmem:[%s0 + $0x10] sm:$0xff]
  %v18 = vld [vmem:[%s0 + $0x18] sm:$0xff]
  %v19 = vld [vmem:[%s0 + $0x20] sm:$0xff]
  %v20 = vld [vmem:[%s0 + $0x28] sm:$0xff]
  %v21 = vld [vmem:[%s0 + $0x30] sm:$0xff]
  %v22 = vld [vmem:[%s0 + $0x38] sm:$0xff]
  %v23 = vld [vmem:[%s0 + $0x40] sm:$0xff]
  %v24 = vld [vmem:[%s0 + $0x48] sm:$0xff]
  %v25 = vld [vmem:[%s0 + $0x50] sm:$0xff]
  %v26 = vld [vmem:[%s0 + $0x58] sm:$0xff]
  %v27 = vld [vmem:[%s0 + $0x60] sm:$0x7]
  %v28 = vld [vmem:[%s0 + $0x68] sm:$0x7]
  %v29 = vld [vmem:[%s0 + $0x70] sm:$0x7]
  %v30 = vld [vmem:[%s0 + $0x78] sm:$0x7]
  %v31 = vld [vmem:[%s2] sm:$0x3f]
  %33 = vset.pattern.permute.xlu0 0
  %34 = vperm.xlu0 %33, %v31
  %v35 = vpop.permute.xlu0 %34
  %vm37 = vcmask 220160
  %v39 = vsel %vm37, %v14, 0
  %vm41 = vcmask 1042432
  %v43 = vsel %vm41, %v27, 0
  %v46 = vsel %vm41, %v28, 0
  %v49 = vsel %vm41, %v29, 0
  %v52 = vsel %vm41, %v30, 0
  %54 = vmatpush.msra.mxu0 0.0
  %55 = vmatpush.msra.mxu0 0.0
  %56 = vmatpush.msra.mxu0 0.0
  %57 = vmatpush.msra.mxu0 0.0
  %58 = vmatpush.msra.mxu0 0.0
  %59 = vmatpush.msra.mxu0 0.0
  %60 = vmatpush.msra.mxu0 0.0
  %61 = vmatpush.msra.mxu0 0.0
  %62 = vmatpush.msra.mxu0 0.0
  %63 = vmatpush.msra.mxu0 0.0
  %64 = vmatpush.msra.mxu0 0.0
  %65 = vmatpush.msra.mxu0 0.0
  %66 = vmatpush.msra.mxu0 %v43
  %67 = vmatpush.msra.mxu0 %v23
  %68 = vmatpush.msra.mxu0 %v19
  %69 = vmatpush.msra.mxu0 %v15
  %70 = vmatmul.f32.gmra.mxu0 %v39
  %v71 = vpop.f32.mrf.mxu0
  %v72 = vadd.f32 %v35, %v71
  %73 = vdwg.mxu0
  %74 = vmatpush.msra.mxu0 0.0
  %75 = vmatpush.msra.mxu0 0.0
  %76 = vmatpush.msra.mxu0 0.0
  %77 = vmatpush.msra.mxu0 0.0
  %78 = vmatpush.msra.mxu0 0.0
  %79 = vmatpush.msra.mxu0 0.0
  %80 = vmatpush.msra.mxu0 0.0
  %81 = vmatpush.msra.mxu0 0.0
  %82 = vmatpush.msra.mxu0 0.0
  %83 = vmatpush.msra.mxu0 0.0
  %84 = vmatpush.msra.mxu0 0.0
  %85 = vmatpush.msra.mxu0 0.0
  %86 = vmatpush.msra.mxu0 %v46
  %87 = vmatpush.msra.mxu0 %v24
  %88 = vmatpush.msra.mxu0 %v20
  %89 = vmatpush.msra.mxu0 %v16
  %90 = vmatmul.f32.gmra.mxu0 %v39
  %v91 = vpop.f32.mrf.mxu0
  %v92 = vadd.f32 %v35, %v91
  %93 = vdwg.mxu0
  %94 = vmatpush.msra.mxu0 0.0
  %95 = vmatpush.msra.mxu0 0.0
  %96 = vmatpush.msra.mxu0 0.0
  %97 = vmatpush.msra.mxu0 0.0
  %98 = vmatpush.msra.mxu0 0.0
  %99 = vmatpush.msra.mxu0 0.0
  %100 = vmatpush.msra.mxu0 0.0
  %101 = vmatpush.msra.mxu0 0.0
  %102 = vmatpush.msra.mxu0 0.0
  %103 = vmatpush.msra.mxu0 0.0
  %104 = vmatpush.msra.mxu0 0.0
  %105 = vmatpush.msra.mxu0 0.0
  %106 = vmatpush.msra.mxu0 %v49
  %107 = vmatpush.msra.mxu0 %v25
  %108 = vmatpush.msra.mxu0 %v21
  %109 = vmatpush.msra.mxu0 %v17
  %110 = vmatmul.f32.gmra.mxu0 %v39
  %v111 = vpop.f32.mrf.mxu0
  %v112 = vadd.f32 %v35, %v111
  %113 = vdwg.mxu0
  %114 = vmatpush.msra.mxu0 0.0
  %115 = vmatpush.msra.mxu0 0.0
  %116 = vmatpush.msra.mxu0 0.0
  %117 = vmatpush.msra.mxu0 0.0
  %118 = vmatpush.msra.mxu0 0.0
  %119 = vmatpush.msra.mxu0 0.0
  %120 = vmatpush.msra.mxu0 0.0
  %121 = vmatpush.msra.mxu0 0.0
  %122 = vmatpush.msra.mxu0 0.0
  %123 = vmatpush.msra.mxu0 0.0
  %124 = vmatpush.msra.mxu0 0.0
  %125 = vmatpush.msra.mxu0 0.0
  %126 = vmatpush.msra.mxu0 %v52
  %127 = vmatpush.msra.mxu0 %v26
  %128 = vmatpush.msra.mxu0 %v22
  %129 = vmatpush.msra.mxu0 %v18
  %130 = vmatmul.f32.gmra.mxu0 %v39
  %v131 = vpop.f32.mrf.mxu0
  %v132 = vadd.f32 %v35, %v131
  %133 = vdwg.mxu0
  %134 = vst [vmem:[%s3] sm:$0x3f] %v72
  %135 = vst [vmem:[%s3 + $0x8] sm:$0x3f] %v92
  %136 = vst [vmem:[%s3 + $0x10] sm:$0x3f] %v112
  %vm137 = vcmask 62464
  %138 = vst.msk [vmem:[%s3 + $0x18] sm:$0x3f] %vm137, %v132
  // Predicated region
  $region14: #{conv2d_pallas.1} parent=0 // pred_check
    _
  $region15: #{conv2d_pallas.1} parent=0 // pred_check_branch
    %140 = sbr.rel (0) target = $region17
  $region16: #{conv2d_pallas.1} parent=0 // pred_region
    _
  $region17: #{conv2d_pallas.1} parent=0 // pred_fallthru
    _
  // Predicated region
  $region18: #{conv2d_pallas.1} parent=0 // pred_check
    _
  $region19: #{conv2d_pallas.1} parent=0 // pred_check_branch
    %142 = sbr.rel (0) target = $region21
  $region20: #{conv2d_pallas.1} parent=0 // pred_region
    _
  $region21: #{conv2d_pallas.1} parent=0 // pred_fallthru
    _

</llo_original>
